<compile_context>
chip_gen: v5e
topology: v5e:2x2
jax: 0.10.0
libtpu: 0.0.40
codegen_flags: <defaults>
</compile_context>

<pallas_src>
import functools

import jax
import jax.numpy as jnp
from jax.experimental import pallas as pl
from jax.experimental.pallas import tpu as pltpu


# ------------------------------ small helpers ------------------------------


def _round_up(x, m):
    return ((x + m - 1) // m) * m


def _pad2d(x, rows, cols, dtype=None):
    """Zero-pad a 2-D array up to (rows, cols), optionally casting."""
    out = jnp.zeros((rows, cols), x.dtype).at[: x.shape[0], : x.shape[1]].set(x)
    return out if dtype is None else out.astype(dtype)


def _prep_layer_params(w_self, w_neigh, bias, f_in_pad, f_out_pad):
    """Stack W_self/W_neigh into one lane-dense (2*f_in_pad, f_out_pad) bf16 matrix
    and pad the bias to a lane-dense (1, f_out_pad) f32 row."""
    ws = _pad2d(w_self, f_in_pad, f_out_pad)
    wn = _pad2d(w_neigh, f_in_pad, f_out_pad)
    w_cat = jnp.concatenate([ws, wn], axis=0).astype(jnp.bfloat16)
    b = _pad2d(bias.reshape(1, -1), 1, f_out_pad)
    return w_cat, b


# ------------------------- fused multi-layer kernel -------------------------


def _fused_sage_kernel(h_ref, *refs, n_dsts):
    """Whole SAGE.forward in one kernel; intermediates stay in VMEM/vregs.

    h_ref       : (n_src0, f_in_pad0)              bf16 input node features
    refs[0:L]   : per-layer block adjacency        (n_dst_l, n_src_l)          bf16
    refs[L:2L]  : per-layer stacked weights        (2*f_in_pad_l, f_out_pad_l) bf16
    refs[2L:3L] : per-layer bias                   (1, f_out_pad_l)            f32
    refs[3L]    : output                           (n_dst_{L-1}, f_out_pad)    f32
    """
    L = len(n_dsts)
    a_refs = refs[0:L]
    w_refs = refs[L:2 * L]
    b_refs = refs[2 * L:3 * L]
    o_ref = refs[3 * L]

    h_f32 = h_ref[...].astype(jnp.float32)
    for l in range(L):
        n_dst = n_dsts[l]
        h_bf = h_f32.astype(jnp.bfloat16)
        # mean neighbor aggregation on the MXU (bf16 operands, f32 accumulation)
        h_neigh = jnp.dot(a_refs[l][...], h_bf, preferred_element_type=jnp.float32)
        # fused self + neighbor projection: one MXU call with doubled K
        feat = jnp.concatenate(
            [h_f32[:n_dst, :].astype(jnp.bfloat16), h_neigh.astype(jnp.bfloat16)],
            axis=-1)
        out = jnp.dot(feat, w_refs[l][...],
                      preferred_element_type=jnp.float32) + b_refs[l][...]
        if l != L - 1:
            # self.activation == F.relu; nn.Dropout is identity in inference mode
            h_f32 = jnp.maximum(out, 0.0)
        else:
            o_ref[...] = out.astype(o_ref.dtype)


def sage_forward_fused(blocks, x, params):
    """Single-pallas_call SAGE forward for sampled blocks that fit in VMEM."""
    L = len(params)
    n_dsts = tuple(int(a.shape[0]) for a in blocks)
    f_ins = [x.shape[1]] + [p["w_self"].shape[1] for p in params[:-1]]
    f_outs = [p["w_self"].shape[1] for p in params]
    f_in_pads = [_round_up(f, 128) for f in f_ins]
    f_out_pads = f_in_pads[1:] + [_round_up(f_outs[-1], 128)]

    # bf16 at the boundary; lane-pad feature dims to 128.
    x_pad = _pad2d(x, x.shape[0], f_in_pads[0], jnp.bfloat16)
    a_bf = [a.astype(jnp.bfloat16) for a in blocks]
    w_cats, b_pads = [], []
    for l, p in enumerate(params):
        w_cat, b_pad = _prep_layer_params(p["w_self"], p["w_neigh"], p["bias"],
                                          f_in_pads[l], f_out_pads[l])
        w_cats.append(w_cat)
        b_pads.append(b_pad)

    out_shape = (n_dsts[-1], f_out_pads[-1])

    def _full(arr):
        shape = tuple(arr.shape)
        return pl.BlockSpec(shape, lambda: (0,) * len(shape))

    in_specs = ([_full(x_pad)] + [_full(a) for a in a_bf]
                + [_full(w) for w in w_cats] + [_full(b) for b in b_pads])
    out_spec = pl.BlockSpec(out_shape, lambda: (0, 0))

    flops = 0
    bytes_accessed = int(x_pad.size) * 2
    for l in range(L):
        flops += 2 * n_dsts[l] * int(blocks[l].shape[1]) * f_in_pads[l]
        flops += 2 * n_dsts[l] * (2 * f_in_pads[l]) * f_out_pads[l]
        bytes_accessed += (int(a_bf[l].size) * 2 + int(w_cats[l].size) * 2
                           + int(b_pads[l].size) * 4)
    bytes_accessed += out_shape[0] * out_shape[1] * 4

    kernel = functools.partial(_fused_sage_kernel, n_dsts=n_dsts)
    out = pl.pallas_call(
        kernel,
        out_shape=jax.ShapeDtypeStruct(out_shape, jnp.float32),
        in_specs=in_specs,
        out_specs=out_spec,
        cost_estimate=pl.CostEstimate(flops=flops, transcendentals=0,
                                      bytes_accessed=bytes_accessed),
    )(x_pad, *a_bf, *w_cats, *b_pads)
    return out[:, :f_outs[-1]]


# ----------------------- tiled single-layer kernel --------------------------


def _sage_tiled_kernel(a_ref, hk_ref, hdst_ref, w_ref, b_ref, o_ref, acc_ref,
                       *, apply_relu):
    """One SAGEConv('mean') layer tiled over (n_dst, n_src); n_src is the reduction."""
    k = pl.program_id(1)

    @pl.when(k == 0)
    def _():
        acc_ref[...] = jnp.zeros_like(acc_ref)

    # partial mean-aggregation accumulated in f32 VMEM scratch
    acc_ref[...] += jnp.dot(a_ref[...], hk_ref[...],
                            preferred_element_type=jnp.float32)

    @pl.when(k == pl.num_programs(1) - 1)
    def _():
        feat = jnp.concatenate(
            [hdst_ref[...], acc_ref[...].astype(hdst_ref.dtype)], axis=-1)
        out = jnp.dot(feat, w_ref[...],
                      preferred_element_type=jnp.float32) + b_ref[...]
        if apply_relu:
            out = jnp.maximum(out, 0.0)
        o_ref[...] = out.astype(o_ref.dtype)


def sage_conv_mean_tiled(a, h, w_self, w_neigh, bias, *, apply_relu,
                         tm=128, tk=128):
    """Tiled single-layer SAGEConv('mean') for realistic sampled-block sizes.

    grid = (n_dst/tm, n_src/tk); the aggregation reduction (n_src) is the last grid
    axis with a float32 VMEM accumulator (init/finalize via pl.when); the n_dst axis
    is "parallel" (sharded across TensorCores on v7x, no-op on v5e/v6e).
    """
    n_dst, n_src = a.shape
    f_in, f_out = w_self.shape
    f_in_pad = _round_up(f_in, 128)
    f_out_pad = _round_up(f_out, 128)
    n_dst_pad = _round_up(n_dst, tm)
    n_src_pad = _round_up(n_src, tk)
    h_rows = max(n_src_pad, n_dst_pad)

    a_p = _pad2d(a, n_dst_pad, n_src_pad, jnp.bfloat16)
    h_p = _pad2d(h, h_rows, f_in_pad, jnp.bfloat16)
    w_cat, b_pad = _prep_layer_params(w_self, w_neigh, bias, f_in_pad, f_out_pad)

    grid = (n_dst_pad // tm, n_src_pad // tk)
    kernel = functools.partial(_sage_tiled_kernel, apply_relu=apply_relu)

    flops = (2 * n_dst_pad * n_src_pad * f_in_pad
             + 2 * n_dst_pad * (2 * f_in_pad) * f_out_pad)
    bytes_accessed = (int(a_p.size) * 2 + int(h_p.size) * 2 * 2
                      + int(w_cat.size) * 2 + int(b_pad.size) * 4
                      + n_dst_pad * f_out_pad * 4)

    out = pl.pallas_call(
        kernel,
        out_shape=jax.ShapeDtypeStruct((n_dst_pad, f_out_pad), jnp.float32),
        grid_spec=pltpu.PrefetchScalarGridSpec(
            num_scalar_prefetch=0,
            grid=grid,
            in_specs=[
                pl.BlockSpec((tm, tk), lambda i, k: (i, k)),          # A tile
                pl.BlockSpec((tk, f_in_pad), lambda i, k: (k, 0)),    # H rows (reduction)
                pl.BlockSpec((tm, f_in_pad), lambda i, k: (i, 0)),    # H_dst rows (prefix)
                pl.BlockSpec((2 * f_in_pad, f_out_pad), lambda i, k: (0, 0)),
                pl.BlockSpec((1, f_out_pad), lambda i, k: (0, 0)),
            ],
            out_specs=pl.BlockSpec((tm, f_out_pad), lambda i, k: (i, 0)),
            scratch_shapes=[pltpu.VMEM((tm, f_in_pad), jnp.float32)],
        ),
        compiler_params=pltpu.CompilerParams(
            dimension_semantics=("parallel", "arbitrary")),
        cost_estimate=pl.CostEstimate(flops=flops, transcendentals=0,
                                      bytes_accessed=bytes_accessed),
    )(a_p, h_p, h_p, w_cat, b_pad)
    return out[:n_dst, :f_out]


# ------------------------------ public forward ------------------------------


def sage_forward(blocks, x, params, *, fused_vmem_budget=32 * 1024 * 1024):
    """Mirrors SAGE.forward: fused single kernel when the whole minibatch fits
    comfortably in VMEM; otherwise one tiled pallas_call per layer."""
    # TODO(synk): nn.Dropout is stochastic in training mode; inference-mode (identity) here.
    est = 2 * x.shape[0] * _round_up(x.shape[1], 128)
    for a, p in zip(blocks, params):
        f_in, f_out = p["w_self"].shape
        est += 2 * int(a.size)
        est += 2 * 2 * _round_up(f_in, 128) * _round_up(f_out, 128)
        est += 6 * int(a.shape[0]) * _round_up(f_out, 128)
    if est <= fused_vmem_budget:
        return sage_forward_fused(blocks, x, params)

    h = x
    L = len(params)
    for l, (a, p) in enumerate(zip(blocks, params)):
        h = sage_conv_mean_tiled(a, h, p["w_self"], p["w_neigh"], p["bias"],
                                 apply_relu=(l != L - 1))
    return h


# ------------------------------- references ---------------------------------


def _reference_forward_f32(blocks, x, params):
    """Original full-precision SAGE forward math."""
    h = x
    L = len(params)
    for l, (a, p) in enumerate(zip(blocks, params)):
        n_dst = a.shape[0]
        h_dst = h[:n_dst]
        h_neigh = a @ h
        h = h_dst @ p["w_self"] + h_neigh @ p["w_neigh"] + p["bias"].reshape(1, -1)
        if l != L - 1:
            h = jnp.maximum(h, 0.0)
    return h


def _reference_forward_bf16(blocks, x, params):
    """Same math as the fused kernel: bf16 matmul operands, f32 accumulation."""
    L = len(params)
    h_f32 = x.astype(jnp.bfloat16).astype(jnp.float32)
    for l, (a, p) in enumerate(zip(blocks, params)):
        n_dst = a.shape[0]
        a_bf = a.astype(jnp.bfloat16)
        h_bf = h_f32.astype(jnp.bfloat16)
        h_neigh = jnp.dot(a_bf, h_bf, preferred_element_type=jnp.float32)
        h_dst = h_f32[:n_dst].astype(jnp.bfloat16)
        out = (jnp.dot(h_dst, p["w_self"].astype(jnp.bfloat16),
                       preferred_element_type=jnp.float32)
               + jnp.dot(h_neigh.astype(jnp.bfloat16),
                         p["w_neigh"].astype(jnp.bfloat16),
                         preferred_element_type=jnp.float32)
               + p["bias"].reshape(1, -1))
        h_f32 = jnp.maximum(out, 0.0) if l != L - 1 else out
    return h_f32


def _reference_layer_bf16(a, h, w_self, w_neigh, bias, *, apply_relu):
    a_bf = a.astype(jnp.bfloat16)
    h_bf = h.astype(jnp.bfloat16)
    h_neigh = jnp.dot(a_bf, h_bf, preferred_element_type=jnp.float32)
    h_dst = h_bf[: a.shape[0]]
    out = (jnp.dot(h_dst, w_self.astype(jnp.bfloat16),
                   preferred_element_type=jnp.float32)
           + jnp.dot(h_neigh.astype(jnp.bfloat16), w_neigh.astype(jnp.bfloat16),
                     preferred_element_type=jnp.float32)
           + bias.reshape(1, -1))
    return jnp.maximum(out, 0.0) if apply_relu else out


# ------------------------------ test utilities ------------------------------


def _make_block_adj(key, n_dst, n_src):
    """Dense row-normalized mean-aggregation matrix for a sampled DGL block
    (dst nodes are the first n_dst src nodes; every dst has >= 1 in-edge)."""
    mask = (jax.random.uniform(key, (n_dst, n_src)) < 0.3).astype(jnp.float32)
    mask = mask.at[jnp.arange(n_dst), jnp.arange(n_dst)].set(1.0)
    deg = jnp.sum(mask, axis=1, keepdims=True)
    return mask / deg


def _init_sage_params(key, in_feats, n_hidden, n_classes, n_layers):
    dims = [in_feats] + [n_hidden] * (n_layers - 1) + [n_classes]
    params = []
    for l in range(n_layers):
        f_in, f_out = dims[l], dims[l + 1]
        k1, k2, key = jax.random.split(key, 3)
        scale = 1.0 / jnp.sqrt(jnp.float32(f_in))
        params.append({
            "w_self": jax.random.normal(k1, (f_in, f_out), jnp.float32) * scale,
            "w_neigh": jax.random.normal(k2, (f_in, f_out), jnp.float32) * scale,
            "bias": jnp.zeros((1, f_out), jnp.float32),
        })
    return params


if __name__ == "__main__":
    key = jax.random.PRNGKey(0)

    # --- 1) fused multi-layer minibatch forward (SAGE.forward on sampled blocks) ---
    in_feats, n_hidden, n_classes, n_layers = 32, 32, 16, 2
    n_src0, n_dst0, n_dst1 = 64, 32, 8          # sampled block fan-outs (batch of 8 dst nodes)

    k_x, k_a0, k_a1, k_w, key = jax.random.split(key, 5)
    x = jax.random.normal(k_x, (n_src0, in_feats), jnp.float32)
    blocks = [
        _make_block_adj(k_a0, n_dst0, n_src0),   # layer-0 block: (32, 64)
        _make_block_adj(k_a1, n_dst1, n_dst0),   # layer-1 block: (8, 32)
    ]
    params = _init_sage_params(k_w, in_feats, n_hidden, n_classes, n_layers)

    out = jax.block_until_ready(sage_forward(blocks, x, params))
    assert out.shape == (n_dst1, n_classes)

    ref_bf16 = _reference_forward_bf16(blocks, x, params)
    ref_f32 = _reference_forward_f32(blocks, x, params)
    assert jnp.allclose(out, ref_bf16, atol=2e-3, rtol=2e-3), \
        float(jnp.max(jnp.abs(out - ref_bf16)))
    assert jnp.allclose(out, ref_f32, atol=5e-2, rtol=5e-2), \
        float(jnp.max(jnp.abs(out - ref_f32)))

    # --- 2) tiled single-layer path (realistic sampled-block sizes, gridded) ---
    n_dst, n_src, f_in, f_out = 256, 512, 128, 64
    k_a, k_h, k_ws, k_wn, key = jax.random.split(key, 5)
    a_big = _make_block_adj(k_a, n_dst, n_src)
    h_big = jax.random.normal(k_h, (n_src, f_in), jnp.float32)
    w_self = jax.random.normal(k_ws, (f_in, f_out), jnp.float32) / jnp.sqrt(jnp.float32(f_in))
    w_neigh = jax.random.normal(k_wn, (f_in, f_out), jnp.float32) / jnp.sqrt(jnp.float32(f_in))
    bias = jnp.zeros((1, f_out), jnp.float32)

    out2 = jax.block_until_ready(
        sage_conv_mean_tiled(a_big, h_big, w_self, w_neigh, bias, apply_relu=True))
    assert out2.shape == (n_dst, f_out)
    ref2 = _reference_layer_bf16(a_big, h_big, w_self, w_neigh, bias, apply_relu=True)
    assert jnp.allclose(out2, ref2, atol=2e-3, rtol=2e-3), \
        float(jnp.max(jnp.abs(out2 - ref2)))

    print("KERNEL_OK")
</pallas_src>

<mosaic_0001>
module attributes {stable_mosaic.version = 11 : i64} {
  func.func @_fused_sage_kernel(%arg0: memref<64x128xbf16, #tpu.memory_space<vmem>>, %arg1: memref<32x64xbf16, #tpu.memory_space<vmem>>, %arg2: memref<8x32xbf16, #tpu.memory_space<vmem>>, %arg3: memref<256x128xbf16, #tpu.memory_space<vmem>>, %arg4: memref<256x128xbf16, #tpu.memory_space<vmem>>, %arg5: memref<1x128xf32, #tpu.memory_space<vmem>>, %arg6: memref<1x128xf32, #tpu.memory_space<vmem>>, %arg7: memref<8x128xf32, #tpu.memory_space<vmem>>) attributes {dimension_semantics = [], scalar_prefetch = 0 : i64, scratch_operands = 0 : i64, tpu.core_type = #tpu.core_type<tc>} {
    %c0 = arith.constant 0 : index
    %c0_0 = arith.constant 0 : index
    %0 = vector.load %arg0[%c0, %c0_0] : memref<64x128xbf16, #tpu.memory_space<vmem>>, vector<64x128xbf16>
    %1 = arith.extf %0 : vector<64x128xbf16> to vector<64x128xf32>
    %2 = arith.truncf %1 : vector<64x128xf32> to vector<64x128xbf16>
    %c0_1 = arith.constant 0 : index
    %c0_2 = arith.constant 0 : index
    %3 = vector.load %arg1[%c0_1, %c0_2] : memref<32x64xbf16, #tpu.memory_space<vmem>>, vector<32x64xbf16>
    %cst = arith.constant dense<0.000000e+00> : vector<32x128xf32>
    %4 = tpu.matmul %3, %2, %cst {dimension_numbers = #tpu.dot_dimension_numbers<[1], [0], [0], [1], [0, 0, 1, 1], [], []>} : vector<32x64xbf16>, vector<64x128xbf16>, vector<32x128xf32> -> vector<32x128xf32>
    %5 = vector.extract_strided_slice %1 {offsets = [0, 0], sizes = [32, 128], strides = [1, 1]} : vector<64x128xf32> to vector<32x128xf32>
    %6 = arith.truncf %5 : vector<32x128xf32> to vector<32x128xbf16>
    %7 = arith.truncf %4 : vector<32x128xf32> to vector<32x128xbf16>
    %8 = tpu.concatenate %6, %7 in 1 : vector<32x128xbf16>, vector<32x128xbf16> -> vector<32x256xbf16>
    %c0_3 = arith.constant 0 : index
    %c0_4 = arith.constant 0 : index
    %9 = vector.load %arg3[%c0_3, %c0_4] : memref<256x128xbf16, #tpu.memory_space<vmem>>, vector<256x128xbf16>
    %cst_5 = arith.constant dense<0.000000e+00> : vector<32x128xf32>
    %10 = tpu.matmul %8, %9, %cst_5 {dimension_numbers = #tpu.dot_dimension_numbers<[1], [0], [0], [1], [0, 0, 1, 1], [], []>} : vector<32x256xbf16>, vector<256x128xbf16>, vector<32x128xf32> -> vector<32x128xf32>
    %c0_6 = arith.constant 0 : index
    %c0_7 = arith.constant 0 : index
    %11 = vector.load %arg5[%c0_6, %c0_7] : memref<1x128xf32, #tpu.memory_space<vmem>>, vector<1x128xf32>
    %12 = vector.broadcast %11 : vector<1x128xf32> to vector<32x128xf32>
    %13 = arith.addf %10, %12 : vector<32x128xf32>
    %cst_8 = arith.constant 0.000000e+00 : f32
    %14 = vector.broadcast %cst_8 : f32 to vector<32x128xf32>
    %15 = arith.maximumf %13, %14 : vector<32x128xf32>
    %16 = arith.truncf %15 : vector<32x128xf32> to vector<32x128xbf16>
    %c0_9 = arith.constant 0 : index
    %c0_10 = arith.constant 0 : index
    %17 = vector.load %arg2[%c0_9, %c0_10] : memref<8x32xbf16, #tpu.memory_space<vmem>>, vector<8x32xbf16>
    %cst_11 = arith.constant dense<0.000000e+00> : vector<8x128xf32>
    %18 = tpu.matmul %17, %16, %cst_11 {dimension_numbers = #tpu.dot_dimension_numbers<[1], [0], [0], [1], [0, 0, 1, 1], [], []>} : vector<8x32xbf16>, vector<32x128xbf16>, vector<8x128xf32> -> vector<8x128xf32>
    %19 = vector.extract_strided_slice %15 {offsets = [0, 0], sizes = [8, 128], strides = [1, 1]} : vector<32x128xf32> to vector<8x128xf32>
    %20 = arith.truncf %19 : vector<8x128xf32> to vector<8x128xbf16>
    %21 = arith.truncf %18 : vector<8x128xf32> to vector<8x128xbf16>
    %22 = tpu.concatenate %20, %21 in 1 : vector<8x128xbf16>, vector<8x128xbf16> -> vector<8x256xbf16>
    %c0_12 = arith.constant 0 : index
    %c0_13 = arith.constant 0 : index
    %23 = vector.load %arg4[%c0_12, %c0_13] : memref<256x128xbf16, #tpu.memory_space<vmem>>, vector<256x128xbf16>
    %cst_14 = arith.constant dense<0.000000e+00> : vector<8x128xf32>
    %24 = tpu.matmul %22, %23, %cst_14 {dimension_numbers = #tpu.dot_dimension_numbers<[1], [0], [0], [1], [0, 0, 1, 1], [], []>} : vector<8x256xbf16>, vector<256x128xbf16>, vector<8x128xf32> -> vector<8x128xf32>
    %c0_15 = arith.constant 0 : index
    %c0_16 = arith.constant 0 : index
    %25 = vector.load %arg6[%c0_15, %c0_16] : memref<1x128xf32, #tpu.memory_space<vmem>>, vector<1x128xf32>
    %26 = vector.broadcast %25 : vector<1x128xf32> to vector<8x128xf32>
    %27 = arith.addf %24, %26 : vector<8x128xf32>
    %c0_17 = arith.constant 0 : index
    %c0_18 = arith.constant 0 : index
    %28 = vector.load %arg7[%c0_17, %c0_18] : memref<8x128xf32, #tpu.memory_space<vmem>>, vector<8x128xf32>
    tpu.vector_store %arg7[%c0_17, %c0_18], %27 {strides = array<i32>} : memref<8x128xf32, #tpu.memory_space<vmem>>, vector<8x128xf32>,
    return
  }
}

</mosaic_0001>

<llo_original>
// kernel: tpu_custom_call.1
$region0: #{tpu_custom_call.1}
  #allocation0 [shape = 'u32[]', space=smem, size = 0x4, offset = 0x4, fixed_abs, tag = 'smem constant byte address 0x4 - core index']
  #allocation1 [shape = 'u32[72,128]{1,0:T(1,128)}', space=vmem, size = 0x9000, scoped, tag = 'internal scratch']
  %s0 = inlined_call_operand.hbm [shape: bf16[64,128], index: 0, kind: input, shape index: {}]
  %s1 = inlined_call_operand.hbm [shape: bf16[32,64], index: 1, kind: input, shape index: {}]
  %s2 = inlined_call_operand.hbm [shape: bf16[8,32], index: 2, kind: input, shape index: {}]
  %s3 = inlined_call_operand.hbm [shape: bf16[256,128], index: 3, kind: input, shape index: {}]
  %s4 = inlined_call_operand.hbm [shape: bf16[256,128], index: 4, kind: input, shape index: {}]
  %s5 = inlined_call_operand.vmem [shape: f32[1,128], index: 5, kind: input, shape index: {}]
  %s6 = inlined_call_operand.vmem [shape: f32[1,128], index: 6, kind: input, shape index: {}]
  %s7 = inlined_call_operand.hbm [shape: f32[8,128], index: 7, kind: output, shape index: {}]
  %s8 = sld [smem:[#allocation0]]
  $region58: #{tpu_custom_call.1} parent=0
    _
  %s10 = ssub.s32 1, %s8
  %s11 = scalar_select 0, %s10, %s8
  $region1: #{tpu_custom_call.1} parent=0
    #allocation2 [shape = 'u8[16384]{0}', space=vmem, size = 0x4000, scoped, tag = 'input window, operand 0, single buffered']
    #allocation3 [shape = 's32[1]{0}', space=sflag, size = 0x4, scoped, tag = 'scoped memory for tpu_custom_call.1']
    #allocation4 [shape = 's32[1]{0}', space=sflag, size = 0x4, scoped, tag = 'scoped memory for tpu_custom_call.1']
    #allocation5 [shape = 'u8[8192]{0}', space=vmem, size = 0x2000, scoped, tag = 'input window, operand 1, single buffered']
    #allocation6 [shape = 's32[1]{0}', space=sflag, size = 0x4, scoped, tag = 'scoped memory for tpu_custom_call.1']
    #allocation7 [shape = 'u8[2048]{0}', space=vmem, size = 0x800, scoped, tag = 'input window, operand 2, single buffered']
    #allocation8 [shape = 'u8[65536]{0}', space=vmem, size = 0x10000, scoped, tag = 'input window, operand 3, single buffered']
    #allocation9 [shape = 's32[1]{0}', space=sflag, size = 0x4, scoped, tag = 'scoped memory for tpu_custom_call.1']
    #allocation10 [shape = 'u8[65536]{0}', space=vmem, size = 0x10000, scoped, tag = 'input window, operand 4, single buffered']
    #allocation11 [shape = 'u8[4096]{0}', space=vmem, size = 0x1000, scoped, tag = 'output window, operand 0, single buffered']
    %12 = vsyncpa [#allocation3], 0
    %13 = vsyncpa [#allocation6], 0
    %14 = vsyncpa [#allocation9], 0
    %15 = vsyncpa [#allocation4], 0
    // Predicated region
    $region2: #{tpu_custom_call.1} parent=1 // pred_check
      _
    $region3: #{tpu_custom_call.1} parent=1 // pred_check_branch
      %17 = sbr.rel (0) target = $region5
    $region4: #{tpu_custom_call.1} parent=1 // pred_region
      %19 = vsyncadd [#allocation3], 0
      %s20 = sshll.u32 %s0, 4
      %s21 = int_to_ptr.hbm [resolvable:$true] %s20
      %s22 = sshll.u32 [#allocation2], 4
      %s23 = int_to_ptr.vmem [resolvable:$true] %s22
      %28 = dma.hbm_to_vmem [thread:$0]  %s21, 512, %s23, [#allocation3], 64, 64, 4
    $region5: #{tpu_custom_call.1} parent=1 // pred_fallthru
      _
    // Predicated region
    $region6: #{tpu_custom_call.1} parent=1 // pred_check
      _
    $region7: #{tpu_custom_call.1} parent=1 // pred_check_branch
      %30 = sbr.rel (0) target = $region9
    $region8: #{tpu_custom_call.1} parent=1 // pred_region
      %32 = vsyncadd [#allocation6], 0
      %s33 = sshll.u32 %s1, 4
      %s34 = int_to_ptr.hbm [resolvable:$true] %s33
      %s35 = sshll.u32 [#allocation5], 4
      %s36 = int_to_ptr.vmem [resolvable:$true] %s35
      %41 = dma.hbm_to_vmem [thread:$0]  %s34, 256, %s36, [#allocation6], 64, 64, 4
    $region9: #{tpu_custom_call.1} parent=1 // pred_fallthru
      _
    // Predicated region
    $region10: #{tpu_custom_call.1} parent=1 // pred_check
      _
    $region11: #{tpu_custom_call.1} parent=1 // pred_check_branch
      %43 = sbr.rel (0) target = $region13
    $region12: #{tpu_custom_call.1} parent=1 // pred_region
      %45 = vsyncadd [#allocation6], 0
      %s47 = sshll.u32 %s2, 4
      %s48 = int_to_ptr.hbm [resolvable:$true] %s47
      %s49 = sshll.u32 [#allocation7], 4
      %s50 = int_to_ptr.vmem [resolvable:$true] %s49
      %52 = dma.hbm_to_vmem [thread:$0]  %s48, 64, %s50, [#allocation6]
    $region13: #{tpu_custom_call.1} parent=1 // pred_fallthru
      _
    // Predicated region
    $region14: #{tpu_custom_call.1} parent=1 // pred_check
      _
    $region15: #{tpu_custom_call.1} parent=1 // pred_check_branch
      %54 = sbr.rel (0) target = $region17
    $region16: #{tpu_custom_call.1} parent=1 // pred_region
      %56 = vsyncadd [#allocation9], 0
      %s57 = sshll.u32 %s3, 4
      %s58 = int_to_ptr.hbm [resolvable:$true] %s57
      %s59 = sshll.u32 [#allocation8], 4
      %s60 = int_to_ptr.vmem [resolvable:$true] %s59
      %65 = dma.hbm_to_vmem [thread:$0]  %s58, 2048, %s60, [#allocation9], 64, 64, 4
    $region17: #{tpu_custom_call.1} parent=1 // pred_fallthru
      _
    // Predicated region
    $region18: #{tpu_custom_call.1} parent=1 // pred_check
      _
    $region19: #{tpu_custom_call.1} parent=1 // pred_check_branch
      %67 = sbr.rel (0) target = $region21
    $region20: #{tpu_custom_call.1} parent=1 // pred_region
      %69 = vsyncadd [#allocation9], 0
      %s70 = sshll.u32 %s4, 4
      %s71 = int_to_ptr.hbm [resolvable:$true] %s70
      %s72 = sshll.u32 [#allocation10], 4
      %s73 = int_to_ptr.vmem [resolvable:$true] %s72
      %78 = dma.hbm_to_vmem [thread:$0]  %s71, 2048, %s73, [#allocation9], 64, 64, 4
    $region21: #{tpu_custom_call.1} parent=1 // pred_fallthru
      _
    // Predicated region
    $region22: #{tpu_custom_call.1} parent=1 // pred_check
      _
    $region23: #{tpu_custom_call.1} parent=1 // pred_check_branch
      %80 = sbr.rel (0) target = $region25
    $region24: #{tpu_custom_call.1} parent=1 // pred_region
      _
    $region25: #{tpu_custom_call.1} parent=1 // pred_fallthru
      _
    // Predicated region
    $region26: #{tpu_custom_call.1} parent=1 // pred_check
      _
    $region27: #{tpu_custom_call.1} parent=1 // pred_check_branch
      %82 = sbr.rel (0) target = $region29
    $region28: #{tpu_custom_call.1} parent=1 // pred_region
      _
    $region29: #{tpu_custom_call.1} parent=1 // pred_fallthru
      _
    // Predicated region
    $region30: #{tpu_custom_call.1} parent=1 // pred_check
      _
    $region31: #{tpu_custom_call.1} parent=1 // pred_check_branch
      %84 = sbr.rel (0) target = $region33
    $region32: #{tpu_custom_call.1} parent=1 // pred_region
      %86 = dma.done [#allocation3], 512
    $region33: #{tpu_custom_call.1} parent=1 // pred_fallthru
      _
    // Predicated region
    $region34: #{tpu_custom_call.1} parent=1 // pred_check
      _
    $region35: #{tpu_custom_call.1} parent=1 // pred_check_branch
      %88 = sbr.rel (0) target = $region37
    $region36: #{tpu_custom_call.1} parent=1 // pred_region
      %90 = dma.done [#allocation6], 256
    $region37: #{tpu_custom_call.1} parent=1 // pred_fallthru
      _
    // Predicated region
    $region38: #{tpu_custom_call.1} parent=1 // pred_check
      _
    $region39: #{tpu_custom_call.1} parent=1 // pred_check_branch
      %92 = sbr.rel (0) target = $region41
    $region40: #{tpu_custom_call.1} parent=1 // pred_region
      %94 = dma.done [#allocation6], 64
    $region41: #{tpu_custom_call.1} parent=1 // pred_fallthru
      _
    // Predicated region
    $region42: #{tpu_custom_call.1} parent=1 // pred_check
      _
    $region43: #{tpu_custom_call.1} parent=1 // pred_check_branch
      %96 = sbr.rel (0) target = $region45
    $region44: #{tpu_custom_call.1} parent=1 // pred_region
      %98 = dma.done [#allocation9], 2048
    $region45: #{tpu_custom_call.1} parent=1 // pred_fallthru
      _
    // Predicated region
    $region46: #{tpu_custom_call.1} parent=1 // pred_check
      _
    $region47: #{tpu_custom_call.1} parent=1 // pred_check_branch
      %100 = sbr.rel (0) target = $region49
    $region48: #{tpu_custom_call.1} parent=1 // pred_region
      %102 = dma.done [#allocation9], 2048
    $region49: #{tpu_custom_call.1} parent=1 // pred_fallthru
      _
    %v104 = vld [vmem:[#allocation2] sm:$0xf]
    %v105 = vld [vmem:[#allocation2 + $0x4] sm:$0xf]
    %v106 = vld [vmem:[#allocation2 + $0x8] sm:$0xf]
    %v107 = vld [vmem:[#allocation2 + $0xc] sm:$0xf]
    %v108 = vld [vmem:[#allocation2 + $0x10] sm:$0xf]
    %v109 = vld [vmem:[#allocation2 + $0x14] sm:$0xf]
    %v110 = vld [vmem:[#allocation2 + $0x18] sm:$0xf]
    %v111 = vld [vmem:[#allocation2 + $0x1c] sm:$0xf]
    %v112 = vunpack.c.l.bf16 %v104
    %v113 = vunpack.c.l.bf16 %v105
    %v114 = vunpack.c.l.bf16 %v106
    %v115 = vunpack.c.l.bf16 %v107
    %v116 = vld [vmem:[#allocation5] sm:$0xf]
    %v117 = vld [vmem:[#allocation5 + $0x4] sm:$0xf]
    %v118 = vld [vmem:[#allocation5 + $0x8] sm:$0xf]
    %v119 = vld [vmem:[#allocation5 + $0xc] sm:$0xf]
    %v124 = vunpack.c.l.b16 %v116
    %v125 = vunpack.c.l.b16 %v117
    %v126 = vunpack.c.l.b16 %v118
    %v127 = vunpack.c.l.b16 %v119
    %v128 = vpack.c.b16 %v125, %v124
    %v129 = vpack.c.b16 %v127, %v126
    %v138 = vunpack.c.l.b16 %v104
    %v139 = vunpack.c.l.b16 %v105
    %v140 = vunpack.c.l.b16 %v106
    %v141 = vunpack.c.l.b16 %v107
    %v142 = vunpack.c.l.b16 %v108
    %v143 = vunpack.c.l.b16 %v109
    %v144 = vunpack.c.l.b16 %v110
    %v145 = vunpack.c.l.b16 %v111
    %v146 = vpack.c.b16 %v139, %v138
    %v147 = vpack.c.b16 %v141, %v140
    %v148 = vpack.c.b16 %v143, %v142
    %v149 = vpack.c.b16 %v145, %v144
    %vm154 = vcmask 523264
    %v156 = vsel %vm154, %v128, 0
    %v159 = vsel %vm154, %v129, 0
    %161 = vmatpush.bf16.msra.mxu0 0
    %162 = vmatpush.bf16.msra.mxu0 0
    %163 = vmatpush.bf16.msra.mxu0 0
    %164 = vmatpush.bf16.msra.mxu0 0
    %165 = vmatpush.bf16.msra.mxu0 %v149
    %166 = vmatpush.bf16.msra.mxu0 %v148
    %167 = vmatpush.bf16.msra.mxu0 %v147
    %168 = vmatpush.bf16.msra.mxu0 %v146
    %169 = vmatmul.bf16.gmra.mxu0 %v156
    %v170 = vpop.f32.mrf.mxu0
    %v171 = vadd.f32 0.0, %v170
    %v172 = vpop.f32.mrf.mxu0
    %v173 = vadd.f32 0.0, %v172
    %174 = vmatmul.bf16.gmra.mxu0 %v159
    %v175 = vpop.f32.mrf.mxu0
    %v176 = vadd.f32 0.0, %v175
    %v177 = vpop.f32.mrf.mxu0
    %v178 = vadd.f32 0.0, %v177
    %179 = vdwg.mxu0
    %v180 = vpack.c.bf16 %v112, %v112
    %v181 = vpack.c.bf16 %v113, %v113
    %v182 = vpack.c.bf16 %v114, %v114
    %v183 = vpack.c.bf16 %v115, %v115
    %v184 = vpack.c.bf16 %v171, %v171
    %v185 = vpack.c.bf16 %v173, %v173
    %v186 = vpack.c.bf16 %v176, %v176
    %v187 = vpack.c.bf16 %v178, %v178
    %v192 = vunpack.c.l.b16 %v180
    %v193 = vunpack.c.l.b16 %v181
    %v194 = vunpack.c.l.b16 %v182
    %v195 = vunpack.c.l.b16 %v183
    %v196 = vpack.c.b16 %v193, %v192
    %v197 = vpack.c.b16 %v195, %v194
    %v204 = vunpack.c.l.b16 %v184
    %v205 = vunpack.c.l.b16 %v185
    %v206 = vunpack.c.l.b16 %v186
    %v207 = vunpack.c.l.b16 %v187
    %v208 = vpack.c.b16 %v205, %v204
    %v209 = vpack.c.b16 %v207, %v206
    %v212 = vld [vmem:[#allocation8] sm:$0xf]
    %v213 = vld [vmem:[#allocation8 + $0x4] sm:$0xf]
    %v214 = vld [vmem:[#allocation8 + $0x8] sm:$0xf]
    %v215 = vld [vmem:[#allocation8 + $0xc] sm:$0xf]
    %v216 = vld [vmem:[#allocation8 + $0x10] sm:$0xf]
    %v217 = vld [vmem:[#allocation8 + $0x14] sm:$0xf]
    %v218 = vld [vmem:[#allocation8 + $0x18] sm:$0xf]
    %v219 = vld [vmem:[#allocation8 + $0x1c] sm:$0xf]
    %v220 = vld [vmem:[#allocation8 + $0x20] sm:$0xf]
    %v221 = vld [vmem:[#allocation8 + $0x24] sm:$0xf]
    %v222 = vld [vmem:[#allocation8 + $0x28] sm:$0xf]
    %v223 = vld [vmem:[#allocation8 + $0x2c] sm:$0xf]
    %v224 = vld [vmem:[#allocation8 + $0x30] sm:$0xf]
    %v225 = vld [vmem:[#allocation8 + $0x34] sm:$0xf]
    %v226 = vld [vmem:[#allocation8 + $0x38] sm:$0xf]
    %v227 = vld [vmem:[#allocation8 + $0x3c] sm:$0xf]
    %v228 = vld [vmem:[#allocation8 + $0x40] sm:$0xf]
    %v229 = vld [vmem:[#allocation8 + $0x44] sm:$0xf]
    %v230 = vld [vmem:[#allocation8 + $0x48] sm:$0xf]
    %v231 = vld [vmem:[#allocation8 + $0x4c] sm:$0xf]
    %v232 = vld [vmem:[#allocation8 + $0x50] sm:$0xf]
    %v233 = vld [vmem:[#allocation8 + $0x54] sm:$0xf]
    %v234 = vld [vmem:[#allocation8 + $0x58] sm:$0xf]
    %v235 = vld [vmem:[#allocation8 + $0x5c] sm:$0xf]
    %v236 = vld [vmem:[#allocation8 + $0x60] sm:$0xf]
    %v237 = vld [vmem:[#allocation8 + $0x64] sm:$0xf]
    %v238 = vld [vmem:[#allocation8 + $0x68] sm:$0xf]
    %v239 = vld [vmem:[#allocation8 + $0x6c] sm:$0xf]
    %v240 = vld [vmem:[#allocation8 + $0x70] sm:$0xf]
    %v241 = vld [vmem:[#allocation8 + $0x74] sm:$0xf]
    %v242 = vld [vmem:[#allocation8 + $0x78] sm:$0xf]
    %v243 = vld [vmem:[#allocation8 + $0x7c] sm:$0xf]
    %v244 = vld [vmem:[%s5] sm:$0x1]
    %v246 = vperm.slane %v244, 0
    %v280 = vunpack.c.l.b16 %v212
    %v281 = vunpack.c.l.b16 %v213
    %v282 = vunpack.c.l.b16 %v214
    %v283 = vunpack.c.l.b16 %v215
    %v284 = vunpack.c.l.b16 %v216
    %v285 = vunpack.c.l.b16 %v217
    %v286 = vunpack.c.l.b16 %v218
    %v287 = vunpack.c.l.b16 %v219
    %v288 = vunpack.c.l.b16 %v220
    %v289 = vunpack.c.l.b16 %v221
    %v290 = vunpack.c.l.b16 %v222
    %v291 = vunpack.c.l.b16 %v223
    %v292 = vunpack.c.l.b16 %v224
    %v293 = vunpack.c.l.b16 %v225
    %v294 = vunpack.c.l.b16 %v226
    %v295 = vunpack.c.l.b16 %v227
    %v296 = vunpack.c.l.b16 %v228
    %v297 = vunpack.c.l.b16 %v229
    %v298 = vunpack.c.l.b16 %v230
    %v299 = vunpack.c.l.b16 %v231
    %v300 = vunpack.c.l.b16 %v232
    %v301 = vunpack.c.l.b16 %v233
    %v302 = vunpack.c.l.b16 %v234
    %v303 = vunpack.c.l.b16 %v235
    %v304 = vunpack.c.l.b16 %v236
    %v305 = vunpack.c.l.b16 %v237
    %v306 = vunpack.c.l.b16 %v238
    %v307 = vunpack.c.l.b16 %v239
    %v308 = vunpack.c.l.b16 %v240
    %v309 = vunpack.c.l.b16 %v241
    %v310 = vunpack.c.l.b16 %v242
    %v311 = vunpack.c.l.b16 %v243
    %v312 = vpack.c.b16 %v281, %v280
    %v313 = vpack.c.b16 %v283, %v282
    %v314 = vpack.c.b16 %v285, %v284
    %v315 = vpack.c.b16 %v287, %v286
    %v316 = vpack.c.b16 %v289, %v288
    %v317 = vpack.c.b16 %v291, %v290
    %v318 = vpack.c.b16 %v293, %v292
    %v319 = vpack.c.b16 %v295, %v294
    %v320 = vpack.c.b16 %v297, %v296
    %v321 = vpack.c.b16 %v299, %v298
    %v322 = vpack.c.b16 %v301, %v300
    %v323 = vpack.c.b16 %v303, %v302
    %v324 = vpack.c.b16 %v305, %v304
    %v325 = vpack.c.b16 %v307, %v306
    %v326 = vpack.c.b16 %v309, %v308
    %v327 = vpack.c.b16 %v311, %v310
    %344 = vmatpush.bf16.msra.mxu0 %v319
    %345 = vmatpush.bf16.msra.mxu0 %v318
    %346 = vmatpush.bf16.msra.mxu0 %v317
    %347 = vmatpush.bf16.msra.mxu0 %v316
    %348 = vmatpush.bf16.msra.mxu0 %v315
    %349 = vmatpush.bf16.msra.mxu0 %v314
    %350 = vmatpush.bf16.msra.mxu0 %v313
    %351 = vmatpush.bf16.msra.mxu0 %v312
    %352 = vmatmul.bf16.gmra.mxu0 %v196
    %v353 = vpop.f32.mrf.mxu0
    %v354 = vadd.f32 %v246, %v353
    %v355 = vpop.f32.mrf.mxu0
    %v356 = vadd.f32 %v246, %v355
    %357 = vmatmul.bf16.gmra.mxu0 %v197
    %v358 = vpop.f32.mrf.mxu0
    %v359 = vadd.f32 %v246, %v358
    %v360 = vpop.f32.mrf.mxu0
    %v361 = vadd.f32 %v246, %v360
    %362 = vdwg.mxu0
    %363 = vmatpush.bf16.msra.mxu0 %v327
    %364 = vmatpush.bf16.msra.mxu0 %v326
    %365 = vmatpush.bf16.msra.mxu0 %v325
    %366 = vmatpush.bf16.msra.mxu0 %v324
    %367 = vmatpush.bf16.msra.mxu0 %v323
    %368 = vmatpush.bf16.msra.mxu0 %v322
    %369 = vmatpush.bf16.msra.mxu0 %v321
    %370 = vmatpush.bf16.msra.mxu0 %v320
    %371 = vmatmul.bf16.gmra.mxu0 %v208
    %v372 = vpop.f32.mrf.mxu0
    %v373 = vadd.f32 %v354, %v372
    %v374 = vpop.f32.mrf.mxu0
    %v375 = vadd.f32 %v356, %v374
    %376 = vmatmul.bf16.gmra.mxu0 %v209
    %v377 = vpop.f32.mrf.mxu0
    %v378 = vadd.f32 %v359, %v377
    %v379 = vpop.f32.mrf.mxu0
    %v380 = vadd.f32 %v361, %v379
    %381 = vdwg.mxu0
    %v382 = vmax.f32 %v373, 0.0
    %v383 = vmax.f32 %v375, 0.0
    %v384 = vmax.f32 %v378, 0.0
    %v385 = vmax.f32 %v380, 0.0
    %v386 = vpack.c.bf16 %v383, %v382
    %v387 = vpack.c.bf16 %v385, %v384
    %v388 = vld [vmem:[#allocation7] sm:$0xf]
    %vm389 = vcmask 261120
    %v391 = vsel %vm389, %v388, 0
    %393 = vmatpush.bf16.msra.mxu0 0
    %394 = vmatpush.bf16.msra.mxu0 0
    %395 = vmatpush.bf16.msra.mxu0 0
    %396 = vmatpush.bf16.msra.mxu0 0
    %397 = vmatpush.bf16.msra.mxu0 0
    %398 = vmatpush.bf16.msra.mxu0 0
    %399 = vmatpush.bf16.msra.mxu0 %v387
    %400 = vmatpush.bf16.msra.mxu0 %v386
    %401 = vmatmul.bf16.gmra.mxu0 %v391
    %v402 = vpop.f32.mrf.mxu0
    %v403 = vadd.f32 0.0, %v402
    %v404 = vpop.f32.mrf.mxu0
    %405 = vdwg.mxu0
    %v406 = vpack.c.bf16 %v382, %v382
    %v407 = vpack.c.bf16 %v403, %v403
    %v408 = vld [vmem:[#allocation10] sm:$0xf]
    %v409 = vld [vmem:[#allocation10 + $0x4] sm:$0xf]
    %v410 = vld [vmem:[#allocation10 + $0x8] sm:$0xf]
    %v411 = vld [vmem:[#allocation10 + $0xc] sm:$0xf]
    %v412 = vld [vmem:[#allocation10 + $0x10] sm:$0xf]
    %v413 = vld [vmem:[#allocation10 + $0x14] sm:$0xf]
    %v414 = vld [vmem:[#allocation10 + $0x18] sm:$0xf]
    %v415 = vld [vmem:[#allocation10 + $0x1c] sm:$0xf]
    %v416 = vld [vmem:[#allocation10 + $0x20] sm:$0xf]
    %v417 = vld [vmem:[#allocation10 + $0x24] sm:$0xf]
    %v418 = vld [vmem:[#allocation10 + $0x28] sm:$0xf]
    %v419 = vld [vmem:[#allocation10 + $0x2c] sm:$0xf]
    %v420 = vld [vmem:[#allocation10 + $0x30] sm:$0xf]
    %v421 = vld [vmem:[#allocation10 + $0x34] sm:$0xf]
    %v422 = vld [vmem:[#allocation10 + $0x38] sm:$0xf]
    %v423 = vld [vmem:[#allocation10 + $0x3c] sm:$0xf]
    %v424 = vld [vmem:[#allocation10 + $0x40] sm:$0xf]
    %v425 = vld [vmem:[#allocation10 + $0x44] sm:$0xf]
    %v426 = vld [vmem:[#allocation10 + $0x48] sm:$0xf]
    %v427 = vld [vmem:[#allocation10 + $0x4c] sm:$0xf]
    %v428 = vld [vmem:[#allocation10 + $0x50] sm:$0xf]
    %v429 = vld [vmem:[#allocation10 + $0x54] sm:$0xf]
    %v430 = vld [vmem:[#allocation10 + $0x58] sm:$0xf]
    %v431 = vld [vmem:[#allocation10 + $0x5c] sm:$0xf]
    %v432 = vld [vmem:[#allocation10 + $0x60] sm:$0xf]
    %v433 = vld [vmem:[#allocation10 + $0x64] sm:$0xf]
    %v434 = vld [vmem:[#allocation10 + $0x68] sm:$0xf]
    %v435 = vld [vmem:[#allocation10 + $0x6c] sm:$0xf]
    %v436 = vld [vmem:[#allocation10 + $0x70] sm:$0xf]
    %v437 = vld [vmem:[#allocation10 + $0x74] sm:$0xf]
    %v438 = vld [vmem:[#allocation10 + $0x78] sm:$0xf]
    %v439 = vld [vmem:[#allocation10 + $0x7c] sm:$0xf]
    %v440 = vld [vmem:[%s6] sm:$0x1]
    %v442 = vperm.slane %v440, 0
    %v476 = vunpack.c.l.b16 %v408
    %v477 = vunpack.c.l.b16 %v409
    %v478 = vunpack.c.l.b16 %v410
    %v479 = vunpack.c.l.b16 %v411
    %v480 = vunpack.c.l.b16 %v412
    %v481 = vunpack.c.l.b16 %v413
    %v482 = vunpack.c.l.b16 %v414
    %v483 = vunpack.c.l.b16 %v415
    %v484 = vunpack.c.l.b16 %v416
    %v485 = vunpack.c.l.b16 %v417
    %v486 = vunpack.c.l.b16 %v418
    %v487 = vunpack.c.l.b16 %v419
    %v488 = vunpack.c.l.b16 %v420
    %v489 = vunpack.c.l.b16 %v421
    %v490 = vunpack.c.l.b16 %v422
    %v491 = vunpack.c.l.b16 %v423
    %v492 = vunpack.c.l.b16 %v424
    %v493 = vunpack.c.l.b16 %v425
    %v494 = vunpack.c.l.b16 %v426
    %v495 = vunpack.c.l.b16 %v427
    %v496 = vunpack.c.l.b16 %v428
    %v497 = vunpack.c.l.b16 %v429
    %v498 = vunpack.c.l.b16 %v430
    %v499 = vunpack.c.l.b16 %v431
    %v500 = vunpack.c.l.b16 %v432
    %v501 = vunpack.c.l.b16 %v433
    %v502 = vunpack.c.l.b16 %v434
    %v503 = vunpack.c.l.b16 %v435
    %v504 = vunpack.c.l.b16 %v436
    %v505 = vunpack.c.l.b16 %v437
    %v506 = vunpack.c.l.b16 %v438
    %v507 = vunpack.c.l.b16 %v439
    %v508 = vpack.c.b16 %v477, %v476
    %v509 = vpack.c.b16 %v479, %v478
    %v510 = vpack.c.b16 %v481, %v480
    %v511 = vpack.c.b16 %v483, %v482
    %v512 = vpack.c.b16 %v485, %v484
    %v513 = vpack.c.b16 %v487, %v486
    %v514 = vpack.c.b16 %v489, %v488
    %v515 = vpack.c.b16 %v491, %v490
    %v516 = vpack.c.b16 %v493, %v492
    %v517 = vpack.c.b16 %v495, %v494
    %v518 = vpack.c.b16 %v497, %v496
    %v519 = vpack.c.b16 %v499, %v498
    %v520 = vpack.c.b16 %v501, %v500
    %v521 = vpack.c.b16 %v503, %v502
    %v522 = vpack.c.b16 %v505, %v504
    %v523 = vpack.c.b16 %v507, %v506
    %540 = vmatpush.bf16.msra.mxu0 %v515
    %541 = vmatpush.bf16.msra.mxu0 %v514
    %542 = vmatpush.bf16.msra.mxu0 %v513
    %543 = vmatpush.bf16.msra.mxu0 %v512
    %544 = vmatpush.bf16.msra.mxu0 %v511
    %545 = vmatpush.bf16.msra.mxu0 %v510
    %546 = vmatpush.bf16.msra.mxu0 %v509
    %547 = vmatpush.bf16.msra.mxu0 %v508
    %548 = vmatmul.bf16.gmra.mxu0 %v406
    %v549 = vpop.f32.mrf.mxu0
    %v550 = vadd.f32 %v442, %v549
    %v551 = vpop.f32.mrf.mxu0
    %552 = vdwg.mxu0
    %553 = vmatpush.bf16.msra.mxu0 %v523
    %554 = vmatpush.bf16.msra.mxu0 %v522
    %555 = vmatpush.bf16.msra.mxu0 %v521
    %556 = vmatpush.bf16.msra.mxu0 %v520
    %557 = vmatpush.bf16.msra.mxu0 %v519
    %558 = vmatpush.bf16.msra.mxu0 %v518
    %559 = vmatpush.bf16.msra.mxu0 %v517
    %560 = vmatpush.bf16.msra.mxu0 %v516
    %561 = vmatmul.bf16.gmra.mxu0 %v407
    %v562 = vpop.f32.mrf.mxu0
    %v563 = vadd.f32 %v550, %v562
    %v564 = vpop.f32.mrf.mxu0
    %565 = vdwg.mxu0
    %566 = vst [vmem:[#allocation11] sm:$0xff] %v563
    // Predicated region
    $region50: #{tpu_custom_call.1} parent=1 // pred_check
      _
    $region51: #{tpu_custom_call.1} parent=1 // pred_check_branch
      %568 = sbr.rel (0) target = $region53
    $region52: #{tpu_custom_call.1} parent=1 // pred_region
      %570 = vsyncadd [#allocation4], 0
      %s572 = sshll.u32 [#allocation11], 4
      %s573 = int_to_ptr.vmem [resolvable:$true] %s572
      %s574 = sshll.u32 %s7, 4
      %s575 = int_to_ptr.hbm [resolvable:$true] %s574
      %577 = dma.vmem_to_hbm [thread:$0]  %s573, 128, %s575, [#allocation4]
    $region53: #{tpu_custom_call.1} parent=1 // pred_fallthru
      _
    // Predicated region
    $region54: #{tpu_custom_call.1} parent=1 // pred_check
      _
    $region55: #{tpu_custom_call.1} parent=1 // pred_check_branch
      %579 = sbr.rel (0) target = $region57
    $region56: #{tpu_custom_call.1} parent=1 // pred_region
      %581 = dma.done [#allocation4], 128
    $region57: #{tpu_custom_call.1} parent=1 // pred_fallthru
      _
    %582 = vsyncpa [#allocation3], 1
    %583 = vsyncpa [#allocation6], 1
    %584 = vsyncpa [#allocation9], 1
    %585 = vsyncpa [#allocation4], 1

</llo_original>
